<compile_context>
chip_gen: v6e
topology: v6e:2x2x1
jax: 0.10.0
libtpu: 0.0.40
codegen_flags: <defaults>
</compile_context>

<pallas_src>
import jax
import jax.numpy as jnp
from jax import lax
from jax.experimental import pallas as pl
from jax.experimental.pallas import tpu as pltpu


def _round_up(n, m):
    return (n + m - 1) // m * m


def _choose_tb(b_pad, d_in):
    """Batch-tile size: a multiple of 128 that divides b_pad exactly."""
    cap = 2048  # amortizes ~0.35us per-step overhead; sweep 2048-8192 for huge B
    # VMEM guard: double-buffered f32 x tile + f32/bf16 activations, per row.
    bytes_per_row = 4 * 2 * d_in + 4 * (128 + 64) + 2 * 128 + 16
    budget = 12 * 1024 * 1024  # stay well under the 16 MiB scoped default (v5e)
    cap = min(cap, max(128, (budget // bytes_per_row) // 128 * 128))
    if b_pad >= 256:
        cap = min(cap, b_pad // 2)  # >=2 grid steps -> both v7x TensorCores busy
    cap = max(128, min(cap, b_pad))
    tb = (cap // 128) * 128
    while tb > 128 and b_pad % tb != 0:
        tb -= 128
    return tb


def _mlp_kernel(x_ref, w1t_ref, b1_ref, w2t_ref, b2_ref, w3_ref, b3_ref, o_ref):
    # x tile: (tb, D_in) f32 -> bf16 in-kernel (VPU cast, hidden under MXU work).
    x = x_ref[...].astype(jnp.bfloat16)

    # Layer 1 (feature-major): contract (128, D_in) with (tb, D_in) over D_in
    # -> (128, tb), bf16 MXU operands, f32 accumulation.
    h1 = lax.dot_general(
        w1t_ref[...], x,
        dimension_numbers=(((1,), (1,)), ((), ())),
        preferred_element_type=jnp.float32,
    )
    h1 = jnp.maximum(h1 + b1_ref[...], 0.0)          # bias (128,1) lane-broadcast
    # Dropout(0.2): identity at inference.

    # Layer 2: (64, 128) @ (128, tb) -> (64, tb), bf16 operands, f32 accumulate.
    h2 = jnp.dot(w2t_ref[...], h1.astype(jnp.bfloat16),
                 preferred_element_type=jnp.float32)
    h2 = jnp.maximum(h2 + b2_ref[...], 0.0)
    # Dropout(0.2): identity at inference.

    # Layer 3: Linear(64, 1). N=1 would waste the MXU, so VPU multiply +
    # sublane reduction -> naturally lane-dense (1, tb) row.
    y = jnp.sum(h2 * w3_ref[...], axis=0, keepdims=True) + b3_ref[0, 0]

    o_ref[...] = y                                   # (1, tb) unmasked store


def simple_nn_forward(x, params, *, tb=None):
    """x: (B, D_in) float32. params: w1,b1,w2,b2,w3,b3 with weights as (in, out)."""
    B, D_in = x.shape
    B_pad = _round_up(B, 128)
    if B_pad != B:                                   # <=127-row pad, only if needed
        x = jnp.pad(x, ((0, B_pad - B), (0, 0)))
    if tb is None:
        tb = _choose_tb(B_pad, D_in)
    assert tb % 128 == 0 and B_pad % tb == 0

    # One-time weight prep (tiny): feature-major bf16 weights, f32 bias columns.
    w1t = params["w1"].T.astype(jnp.bfloat16)                 # (128, D_in)
    w2t = params["w2"].T.astype(jnp.bfloat16)                 # (64, 128)
    b1c = params["b1"].reshape(-1, 1).astype(jnp.float32)     # (128, 1)
    b2c = params["b2"].reshape(-1, 1).astype(jnp.float32)     # (64, 1)
    w3c = params["w3"].reshape(-1, 1).astype(jnp.float32)     # (64, 1)
    b3s = params["b3"].reshape(1, 1).astype(jnp.float32)      # (1, 1) -> SMEM

    const = lambda a: pl.BlockSpec(a.shape, lambda i: (0,) * a.ndim)

    out = pl.pallas_call(
        _mlp_kernel,
        out_shape=jax.ShapeDtypeStruct((1, B_pad), jnp.float32),
        grid=(B_pad // tb,),
        in_specs=[
            pl.BlockSpec((tb, D_in), lambda i: (i, 0)),       # x tile (streamed, f32)
            const(w1t),                                       # VMEM-resident weights
            const(b1c),
            const(w2t),
            const(b2c),
            const(w3c),
            pl.BlockSpec(memory_space=pltpu.MemorySpace.SMEM),  # scalar bias b3
        ],
        out_specs=pl.BlockSpec((1, tb), lambda i: (0, i)),    # lane-dense output row
        compiler_params=pltpu.CompilerParams(
            dimension_semantics=("parallel",),
        ),
    )(x, w1t, b1c, w2t, b2c, w3c, b3s)

    return out[0, :B][:, None]


def init_params(key, input_size):
    """Deterministic init mimicking PyTorch nn.Linear (uniform +/- 1/sqrt(fan_in)).
    Weights stored transposed relative to PyTorch: (in_features, out_features)."""
    def linear(k, fan_in, fan_out):
        kw, kb = jax.random.split(k)
        bound = 1.0 / jnp.sqrt(fan_in)
        w = jax.random.uniform(kw, (fan_in, fan_out), jnp.float32, -bound, bound)
        b = jax.random.uniform(kb, (1, fan_out), jnp.float32, -bound, bound)
        return w, b

    k1, k2, k3 = jax.random.split(key, 3)
    w1, b1 = linear(k1, input_size, 128)
    w2, b2 = linear(k2, 128, 64)
    w3, b3 = linear(k3, 64, 1)
    return dict(w1=w1, b1=b1, w2=w2, b2=b2, w3=w3, b3=b3)


def reference_forward(x, params):
    h1 = jnp.maximum(x @ params["w1"] + params["b1"], 0.0)
    h2 = jnp.maximum(h1 @ params["w2"] + params["b2"], 0.0)
    return h2 @ params["w3"] + params["b3"]


if __name__ == "__main__":
    key = jax.random.PRNGKey(0)
    k_x, k_p = jax.random.split(key)

    batch, input_size = 8, 32
    x = jax.random.normal(k_x, (batch, input_size), dtype=jnp.float32)
    params = init_params(k_p, input_size)

    out = simple_nn_forward(x, params)
    out = jax.block_until_ready(out)

    ref = reference_forward(x, params)
    assert out.shape == (batch, 1), out.shape
    # bf16 matmul operands with f32 accumulation -> loosened tolerance vs f32 ref.
    assert jnp.allclose(out, ref, atol=2e-2, rtol=2e-2), "mismatch vs reference"

    print("KERNEL_OK")
</pallas_src>

<mosaic_0001>
module attributes {stable_mosaic.version = 11 : i64} {
  func.func @_mlp_kernel(%arg0: i32, %arg1: memref<128x32xf32, #tpu.memory_space<vmem>>, %arg2: memref<128x32xbf16, #tpu.memory_space<vmem>>, %arg3: memref<128x1xf32, #tpu.memory_space<vmem>>, %arg4: memref<64x128xbf16, #tpu.memory_space<vmem>>, %arg5: memref<64x1xf32, #tpu.memory_space<vmem>>, %arg6: memref<64x1xf32, #tpu.memory_space<vmem>>, %arg7: memref<1x1xf32, #tpu.memory_space<smem>>, %arg8: memref<1x128xf32, #tpu.memory_space<vmem>>) attributes {dimension_semantics = [#tpu.dimension_semantics<parallel>], iteration_bounds = array<i64: 1>, scalar_prefetch = 0 : i64, scratch_operands = 0 : i64, tpu.core_type = #tpu.core_type<tc>, window_params = [{transform_indices = @transform_0, window_bounds = array<i64: 128, 32>}, {pipeline_mode = #tpu.pipeline_mode<synchronous>, transform_indices = @transform_1, window_bounds = array<i64: 128, 32>}, {pipeline_mode = #tpu.pipeline_mode<synchronous>, transform_indices = @transform_2, window_bounds = array<i64: 128, 1>}, {pipeline_mode = #tpu.pipeline_mode<synchronous>, transform_indices = @transform_3, window_bounds = array<i64: 64, 128>}, {pipeline_mode = #tpu.pipeline_mode<synchronous>, transform_indices = @transform_4, window_bounds = array<i64: 64, 1>}, {pipeline_mode = #tpu.pipeline_mode<synchronous>, transform_indices = @transform_5, window_bounds = array<i64: 64, 1>}, {transform_indices = @transform_6, window_bounds = array<i64: 1, 1>}, {transform_indices = @transform_7, window_bounds = array<i64: 1, 128>}]} {
    %c0 = arith.constant 0 : index
    %c0_0 = arith.constant 0 : index
    %0 = vector.load %arg1[%c0, %c0_0] : memref<128x32xf32, #tpu.memory_space<vmem>>, vector<128x32xf32>
    %1 = arith.truncf %0 : vector<128x32xf32> to vector<128x32xbf16>
    %c0_1 = arith.constant 0 : index
    %c0_2 = arith.constant 0 : index
    %2 = vector.load %arg2[%c0_1, %c0_2] : memref<128x32xbf16, #tpu.memory_space<vmem>>, vector<128x32xbf16>
    %cst = arith.constant dense<0.000000e+00> : vector<128x128xf32>
    %3 = tpu.matmul %2, %1, %cst {dimension_numbers = #tpu.dot_dimension_numbers<[1], [1], [0], [0], [0, 0, 1, 0], [], []>} : vector<128x32xbf16>, vector<128x32xbf16>, vector<128x128xf32> -> vector<128x128xf32>
    %c0_3 = arith.constant 0 : index
    %c0_4 = arith.constant 0 : index
    %4 = vector.load %arg3[%c0_3, %c0_4] : memref<128x1xf32, #tpu.memory_space<vmem>>, vector<128x1xf32>
    %5 = vector.broadcast %4 : vector<128x1xf32> to vector<128x128xf32>
    %6 = arith.addf %3, %5 : vector<128x128xf32>
    %cst_5 = arith.constant 0.000000e+00 : f32
    %7 = vector.broadcast %cst_5 : f32 to vector<128x128xf32>
    %8 = arith.maximumf %6, %7 : vector<128x128xf32>
    %c0_6 = arith.constant 0 : index
    %c0_7 = arith.constant 0 : index
    %9 = vector.load %arg4[%c0_6, %c0_7] : memref<64x128xbf16, #tpu.memory_space<vmem>>, vector<64x128xbf16>
    %10 = arith.truncf %8 : vector<128x128xf32> to vector<128x128xbf16>
    %cst_8 = arith.constant dense<0.000000e+00> : vector<64x128xf32>
    %11 = tpu.matmul %9, %10, %cst_8 {dimension_numbers = #tpu.dot_dimension_numbers<[1], [0], [0], [1], [0, 0, 1, 1], [], []>} : vector<64x128xbf16>, vector<128x128xbf16>, vector<64x128xf32> -> vector<64x128xf32>
    %c0_9 = arith.constant 0 : index
    %c0_10 = arith.constant 0 : index
    %12 = vector.load %arg5[%c0_9, %c0_10] : memref<64x1xf32, #tpu.memory_space<vmem>>, vector<64x1xf32>
    %13 = vector.broadcast %12 : vector<64x1xf32> to vector<64x128xf32>
    %14 = arith.addf %11, %13 : vector<64x128xf32>
    %cst_11 = arith.constant 0.000000e+00 : f32
    %15 = vector.broadcast %cst_11 : f32 to vector<64x128xf32>
    %16 = arith.maximumf %14, %15 : vector<64x128xf32>
    %c0_12 = arith.constant 0 : index
    %c0_13 = arith.constant 0 : index
    %17 = vector.load %arg6[%c0_12, %c0_13] : memref<64x1xf32, #tpu.memory_space<vmem>>, vector<64x1xf32>
    %18 = vector.broadcast %17 : vector<64x1xf32> to vector<64x128xf32>
    %19 = arith.mulf %16, %18 : vector<64x128xf32>
    %cst_14 = arith.constant dense<0.000000e+00> : vector<128xf32>
    %20 = vector.multi_reduction <add>, %19, %cst_14 [0] : vector<64x128xf32> to vector<128xf32>
    %21 = vector.shape_cast %20 : vector<128xf32> to vector<1x128xf32>
    %c0_15 = arith.constant 0 : index
    %c0_16 = arith.constant 0 : index
    %22 = memref.load %arg7[%c0_15, %c0_16] : memref<1x1xf32, #tpu.memory_space<smem>>
    %23 = vector.broadcast %22 : f32 to vector<1x128xf32>
    %24 = arith.addf %21, %23 : vector<1x128xf32>
    %c0_17 = arith.constant 0 : index
    %c0_18 = arith.constant 0 : index
    %25 = vector.load %arg8[%c0_17, %c0_18] : memref<1x128xf32, #tpu.memory_space<vmem>>, vector<1x128xf32>
    tpu.vector_store %arg8[%c0_17, %c0_18], %24 {strides = array<i32>} : memref<1x128xf32, #tpu.memory_space<vmem>>, vector<1x128xf32>,
    return
  }
  func.func @transform_0(%arg0: i32) -> (i32, i32) {
    %c0_i32 = arith.constant 0 : i32
    %c0_i32_0 = arith.constant 0 : i32
    return %arg0, %c0_i32 : i32, i32
  }
  func.func @transform_1(%arg0: i32) -> (i32, i32) {
    %c0_i32 = arith.constant 0 : i32
    %c0_i32_0 = arith.constant 0 : i32
    %c0_i32_1 = arith.constant 0 : i32
    return %c0_i32, %c0_i32_0 : i32, i32
  }
  func.func @transform_2(%arg0: i32) -> (i32, i32) {
    %c0_i32 = arith.constant 0 : i32
    %c0_i32_0 = arith.constant 0 : i32
    %c0_i32_1 = arith.constant 0 : i32
    return %c0_i32, %c0_i32_0 : i32, i32
  }
  func.func @transform_3(%arg0: i32) -> (i32, i32) {
    %c0_i32 = arith.constant 0 : i32
    %c0_i32_0 = arith.constant 0 : i32
    %c0_i32_1 = arith.constant 0 : i32
    return %c0_i32, %c0_i32_0 : i32, i32
  }
  func.func @transform_4(%arg0: i32) -> (i32, i32) {
    %c0_i32 = arith.constant 0 : i32
    %c0_i32_0 = arith.constant 0 : i32
    %c0_i32_1 = arith.constant 0 : i32
    return %c0_i32, %c0_i32_0 : i32, i32
  }
  func.func @transform_5(%arg0: i32) -> (i32, i32) {
    %c0_i32 = arith.constant 0 : i32
    %c0_i32_0 = arith.constant 0 : i32
    %c0_i32_1 = arith.constant 0 : i32
    return %c0_i32, %c0_i32_0 : i32, i32
  }
  func.func @transform_6(%arg0: i32) -> (i32, i32) {
    %c0_i32 = arith.constant 0 : i32
    %c0_i32_0 = arith.constant 0 : i32
    %c0_i32_1 = arith.constant 0 : i32
    return %c0_i32, %c0_i32_0 : i32, i32
  }
  func.func @transform_7(%arg0: i32) -> (i32, i32) {
    %c0_i32 = arith.constant 0 : i32
    %c0_i32_0 = arith.constant 0 : i32
    return %c0_i32, %arg0 : i32, i32
  }
}

</mosaic_0001>

<llo_original>
// kernel: tpu_custom_call.1
$region0: #{tpu_custom_call.1}
  #allocation0 [shape = 'u32[]', space=smem, size = 0x4, offset = 0x4, fixed_abs, tag = 'smem constant byte address 0x4 - core index']
  #allocation1 [shape = 'u32[144,128]{1,0:T(1,128)}', space=vmem, size = 0x12000, scoped, tag = 'internal scratch']
  #allocation2 [shape = 'f32[1,1]{1,0:T(1,128)S(6)}', space=smem, size = 0x200, scoped, tag = 'scoped memory for tpu_custom_call.1']
  %s0 = inlined_call_operand.vmem [shape: f32[128,32], index: 0, kind: input, shape index: {}]
  %s1 = inlined_call_operand.vmem [shape: bf16[128,32], index: 1, kind: input, shape index: {}]
  %s2 = inlined_call_operand.vmem [shape: f32[128,1], index: 2, kind: input, shape index: {}]
  %s3 = inlined_call_operand.vmem [shape: bf16[64,128], index: 3, kind: input, shape index: {}]
  %s4 = inlined_call_operand.vmem [shape: f32[64,1], index: 4, kind: input, shape index: {}]
  %s5 = inlined_call_operand.vmem [shape: f32[64,1], index: 5, kind: input, shape index: {}]
  %s6 = inlined_call_operand.<no memory space> [shape: f32[1,1], index: 6, kind: input, shape index: {}]
  %s7 = inlined_call_operand.hbm [shape: f32[1,128], index: 7, kind: output, shape index: {}]
  %s8 = sld [smem:[#allocation0]]
  $region38: #{tpu_custom_call.1} parent=0
    _
  %s10 = ssub.s32 1, %s8
  %s11 = scalar_select 0, %s10, %s8
  %12 = sst [smem:[#allocation2]] %s6
  $region1: #{tpu_custom_call.1} parent=0
    #allocation3 [shape = 'u8[512]{0}', space=vmem, size = 0x400, scoped, tag = 'output window, operand 0, single buffered']
    #allocation4 [shape = 's32[1]{0}', space=sflag, size = 0x4, scoped, tag = 'scoped memory for tpu_custom_call.1']
    %13 = vsyncpa [#allocation4], 0
    // Predicated region
    $region2: #{tpu_custom_call.1} parent=1 // pred_check
      _
    $region3: #{tpu_custom_call.1} parent=1 // pred_check_branch
      %15 = sbr.rel (0) target = $region5
    $region4: #{tpu_custom_call.1} parent=1 // pred_region
      _
    $region5: #{tpu_custom_call.1} parent=1 // pred_fallthru
      _
    // Predicated region
    $region6: #{tpu_custom_call.1} parent=1 // pred_check
      _
    $region7: #{tpu_custom_call.1} parent=1 // pred_check_branch
      %17 = sbr.rel (0) target = $region9
    $region8: #{tpu_custom_call.1} parent=1 // pred_region
      _
    $region9: #{tpu_custom_call.1} parent=1 // pred_fallthru
      _
    // Predicated region
    $region10: #{tpu_custom_call.1} parent=1 // pred_check
      _
    $region11: #{tpu_custom_call.1} parent=1 // pred_check_branch
      %19 = sbr.rel (0) target = $region13
    $region12: #{tpu_custom_call.1} parent=1 // pred_region
      _
    $region13: #{tpu_custom_call.1} parent=1 // pred_fallthru
      _
    // Predicated region
    $region14: #{tpu_custom_call.1} parent=1 // pred_check
      _
    $region15: #{tpu_custom_call.1} parent=1 // pred_check_branch
      %21 = sbr.rel (0) target = $region17
    $region16: #{tpu_custom_call.1} parent=1 // pred_region
      _
    $region17: #{tpu_custom_call.1} parent=1 // pred_fallthru
      _
    // Predicated region
    $region18: #{tpu_custom_call.1} parent=1 // pred_check
      _
    $region19: #{tpu_custom_call.1} parent=1 // pred_check_branch
      %23 = sbr.rel (0) target = $region21
    $region20: #{tpu_custom_call.1} parent=1 // pred_region
      _
    $region21: #{tpu_custom_call.1} parent=1 // pred_fallthru
      _
    // Predicated region
    $region22: #{tpu_custom_call.1} parent=1 // pred_check
      _
    $region23: #{tpu_custom_call.1} parent=1 // pred_check_branch
      %25 = sbr.rel (0) target = $region25
    $region24: #{tpu_custom_call.1} parent=1 // pred_region
      _
    $region25: #{tpu_custom_call.1} parent=1 // pred_fallthru
      _
    // Predicated region
    $region26: #{tpu_custom_call.1} parent=1 // pred_check
      _
    $region27: #{tpu_custom_call.1} parent=1 // pred_check_branch
      %27 = sbr.rel (0) target = $region29
    $region28: #{tpu_custom_call.1} parent=1 // pred_region
      _
    $region29: #{tpu_custom_call.1} parent=1 // pred_fallthru
      _
    %v29 = vld [vmem:[%s0] sm:$0xff]
    %v30 = vld [vmem:[%s0 + $0x8] sm:$0xff]
    %v31 = vld [vmem:[%s0 + $0x10] sm:$0xff]
    %v32 = vld [vmem:[%s0 + $0x18] sm:$0xff]
    %v33 = vld [vmem:[%s0 + $0x20] sm:$0xff]
    %v34 = vld [vmem:[%s0 + $0x28] sm:$0xff]
    %v35 = vld [vmem:[%s0 + $0x30] sm:$0xff]
    %v36 = vld [vmem:[%s0 + $0x38] sm:$0xff]
    %v37 = vld [vmem:[%s0 + $0x40] sm:$0xff]
    %v38 = vld [vmem:[%s0 + $0x48] sm:$0xff]
    %v39 = vld [vmem:[%s0 + $0x50] sm:$0xff]
    %v40 = vld [vmem:[%s0 + $0x58] sm:$0xff]
    %v41 = vld [vmem:[%s0 + $0x60] sm:$0xff]
    %v42 = vld [vmem:[%s0 + $0x68] sm:$0xff]
    %v43 = vld [vmem:[%s0 + $0x70] sm:$0xff]
    %v44 = vld [vmem:[%s0 + $0x78] sm:$0xff]
    %v45 = vpack.c.bf16 %v30, %v29
    %v46 = vpack.c.bf16 %v32, %v31
    %v47 = vpack.c.bf16 %v34, %v33
    %v48 = vpack.c.bf16 %v36, %v35
    %v49 = vpack.c.bf16 %v38, %v37
    %v50 = vpack.c.bf16 %v40, %v39
    %v51 = vpack.c.bf16 %v42, %v41
    %v52 = vpack.c.bf16 %v44, %v43
    %v53 = vld [vmem:[%s1] sm:$0xf]
    %v54 = vld [vmem:[%s1 + $0x4] sm:$0xf]
    %v55 = vld [vmem:[%s1 + $0x8] sm:$0xf]
    %v56 = vld [vmem:[%s1 + $0xc] sm:$0xf]
    %v57 = vld [vmem:[%s1 + $0x10] sm:$0xf]
    %v58 = vld [vmem:[%s1 + $0x14] sm:$0xf]
    %v59 = vld [vmem:[%s1 + $0x18] sm:$0xf]
    %v60 = vld [vmem:[%s1 + $0x1c] sm:$0xf]
    %v61 = vld [vmem:[%s1 + $0x20] sm:$0xf]
    %v62 = vld [vmem:[%s1 + $0x24] sm:$0xf]
    %v63 = vld [vmem:[%s1 + $0x28] sm:$0xf]
    %v64 = vld [vmem:[%s1 + $0x2c] sm:$0xf]
    %v65 = vld [vmem:[%s1 + $0x30] sm:$0xf]
    %v66 = vld [vmem:[%s1 + $0x34] sm:$0xf]
    %v67 = vld [vmem:[%s1 + $0x38] sm:$0xf]
    %v68 = vld [vmem:[%s1 + $0x3c] sm:$0xf]
    %v69 = vld [vmem:[%s2] sm:$0xff]
    %v70 = vld [vmem:[%s2 + $0x8] sm:$0xff]
    %v71 = vld [vmem:[%s2 + $0x10] sm:$0xff]
    %v72 = vld [vmem:[%s2 + $0x18] sm:$0xff]
    %v73 = vld [vmem:[%s2 + $0x20] sm:$0xff]
    %v74 = vld [vmem:[%s2 + $0x28] sm:$0xff]
    %v75 = vld [vmem:[%s2 + $0x30] sm:$0xff]
    %v76 = vld [vmem:[%s2 + $0x38] sm:$0xff]
    %v77 = vld [vmem:[%s2 + $0x40] sm:$0xff]
    %v78 = vld [vmem:[%s2 + $0x48] sm:$0xff]
    %v79 = vld [vmem:[%s2 + $0x50] sm:$0xff]
    %v80 = vld [vmem:[%s2 + $0x58] sm:$0xff]
    %v81 = vld [vmem:[%s2 + $0x60] sm:$0xff]
    %v82 = vld [vmem:[%s2 + $0x68] sm:$0xff]
    %v83 = vld [vmem:[%s2 + $0x70] sm:$0xff]
    %v84 = vld [vmem:[%s2 + $0x78] sm:$0xff]
    %86 = vset.pattern.permute.xlu0 0
    %87 = vperm.xlu0 %86, %v69
    %v88 = vpop.permute.xlu0 %87
    %91 = vset.pattern.permute.xlu0 0
    %92 = vperm.xlu0 %91, %v70
    %v93 = vpop.permute.xlu0 %92
    %96 = vset.pattern.permute.xlu0 0
    %97 = vperm.xlu0 %96, %v71
    %v98 = vpop.permute.xlu0 %97
    %101 = vset.pattern.permute.xlu0 0
    %102 = vperm.xlu0 %101, %v72
    %v103 = vpop.permute.xlu0 %102
    %106 = vset.pattern.permute.xlu0 0
    %107 = vperm.xlu0 %106, %v73
    %v108 = vpop.permute.xlu0 %107
    %111 = vset.pattern.permute.xlu0 0
    %112 = vperm.xlu0 %111, %v74
    %v113 = vpop.permute.xlu0 %112
    %116 = vset.pattern.permute.xlu0 0
    %117 = vperm.xlu0 %116, %v75
    %v118 = vpop.permute.xlu0 %117
    %121 = vset.pattern.permute.xlu0 0
    %122 = vperm.xlu0 %121, %v76
    %v123 = vpop.permute.xlu0 %122
    %126 = vset.pattern.permute.xlu0 0
    %127 = vperm.xlu0 %126, %v77
    %v128 = vpop.permute.xlu0 %127
    %131 = vset.pattern.permute.xlu0 0
    %132 = vperm.xlu0 %131, %v78
    %v133 = vpop.permute.xlu0 %132
    %136 = vset.pattern.permute.xlu0 0
    %137 = vperm.xlu0 %136, %v79
    %v138 = vpop.permute.xlu0 %137
    %141 = vset.pattern.permute.xlu0 0
    %142 = vperm.xlu0 %141, %v80
    %v143 = vpop.permute.xlu0 %142
    %146 = vset.pattern.permute.xlu0 0
    %147 = vperm.xlu0 %146, %v81
    %v148 = vpop.permute.xlu0 %147
    %151 = vset.pattern.permute.xlu0 0
    %152 = vperm.xlu0 %151, %v82
    %v153 = vpop.permute.xlu0 %152
    %156 = vset.pattern.permute.xlu0 0
    %157 = vperm.xlu0 %156, %v83
    %v158 = vpop.permute.xlu0 %157
    %161 = vset.pattern.permute.xlu0 0
    %162 = vperm.xlu0 %161, %v84
    %v163 = vpop.permute.xlu0 %162
    %v181 = vunpack.c.l.b16 %v53
    %v182 = vunpack.c.l.b16 %v54
    %v183 = vunpack.c.l.b16 %v55
    %v184 = vunpack.c.l.b16 %v56
    %v185 = vunpack.c.l.b16 %v57
    %v186 = vunpack.c.l.b16 %v58
    %v187 = vunpack.c.l.b16 %v59
    %v188 = vunpack.c.l.b16 %v60
    %v189 = vunpack.c.l.b16 %v61
    %v190 = vunpack.c.l.b16 %v62
    %v191 = vunpack.c.l.b16 %v63
    %v192 = vunpack.c.l.b16 %v64
    %v193 = vunpack.c.l.b16 %v65
    %v194 = vunpack.c.l.b16 %v66
    %v195 = vunpack.c.l.b16 %v67
    %v196 = vunpack.c.l.b16 %v68
    %v197 = vpack.c.b16 %v182, %v181
    %v198 = vpack.c.b16 %v184, %v183
    %v199 = vpack.c.b16 %v186, %v185
    %v200 = vpack.c.b16 %v188, %v187
    %v201 = vpack.c.b16 %v190, %v189
    %v202 = vpack.c.b16 %v192, %v191
    %v203 = vpack.c.b16 %v194, %v193
    %v204 = vpack.c.b16 %v196, %v195
    %vm205 = vcmask 261120
    %v207 = vsel %vm205, %v197, 0
    %v210 = vsel %vm205, %v198, 0
    %v213 = vsel %vm205, %v199, 0
    %v216 = vsel %vm205, %v200, 0
    %v219 = vsel %vm205, %v201, 0
    %v222 = vsel %vm205, %v202, 0
    %v225 = vsel %vm205, %v203, 0
    %v228 = vsel %vm205, %v204, 0
    %v231 = vsel %vm205, %v45, 0
    %v234 = vsel %vm205, %v46, 0
    %v237 = vsel %vm205, %v47, 0
    %v240 = vsel %vm205, %v48, 0
    %v243 = vsel %vm205, %v49, 0
    %v246 = vsel %vm205, %v50, 0
    %v249 = vsel %vm205, %v51, 0
    %v252 = vsel %vm205, %v52, 0
    %254 = vmatprep.subr.bf16.mxu0 0
    %255 = vmatpush1.bf16.xpose.msra.mxu0 %v252
    %256 = vmatprep.subr.bf16.mxu0 0
    %257 = vmatpush1.bf16.xpose.msra.mxu0 %v249
    %258 = vmatprep.subr.bf16.mxu0 0
    %259 = vmatpush1.bf16.xpose.msra.mxu0 %v246
    %260 = vmatprep.subr.bf16.mxu0 0
    %261 = vmatpush1.bf16.xpose.msra.mxu0 %v243
    %262 = vmatprep.subr.bf16.mxu0 0
    %263 = vmatpush1.bf16.xpose.msra.mxu0 %v240
    %264 = vmatprep.subr.bf16.mxu0 0
    %265 = vmatpush1.bf16.xpose.msra.mxu0 %v237
    %266 = vmatprep.subr.bf16.mxu0 0
    %267 = vmatpush1.bf16.xpose.msra.mxu0 %v234
    %268 = vmatprep.subr.bf16.mxu0 0
    %269 = vmatpush1.bf16.xpose.msra.mxu0 %v231
    %270 = vmatprep.subr.bf16.mxu0 0
    %271 = vmatpush2.bf16.xpose.msra.mxu0 0
    %272 = vmatprep.subr.bf16.mxu0 0
    %273 = vmatpush2.bf16.xpose.msra.mxu0 0
    %274 = vmatprep.subr.bf16.mxu0 0
    %275 = vmatpush2.bf16.xpose.msra.mxu0 0
    %276 = vmatprep.subr.bf16.mxu0 0
    %277 = vmatpush2.bf16.xpose.msra.mxu0 0
    %278 = vmatprep.subr.bf16.mxu0 0
    %279 = vmatpush2.bf16.xpose.msra.mxu0 0
    %280 = vmatprep.subr.bf16.mxu0 0
    %281 = vmatpush2.bf16.xpose.msra.mxu0 0
    %282 = vmatprep.subr.bf16.mxu0 0
    %283 = vmatpush2.bf16.xpose.msra.mxu0 0
    %284 = vmatprep.subr.bf16.mxu0 0
    %285 = vmatpush2.bf16.xpose.msra.mxu0 0
    %286 = vmatprep.mubr.bf16.mxu0 0
    %287 = vmatmul.mubr.bf16.gmra.mxu0 %v207
    %v288 = vpop.f32.mrf.mxu0
    %v289 = vadd.f32 %v88, %v288
    %v290 = vpop.f32.mrf.mxu0
    %v291 = vpop.f32.mrf.mxu0
    %v292 = vadd.f32 %v93, %v291
    %v293 = vpop.f32.mrf.mxu0
    %294 = vmatprep.mubr.bf16.mxu0 0
    %295 = vmatmul.mubr.bf16.gmra.mxu0 %v210
    %v296 = vpop.f32.mrf.mxu0
    %v297 = vadd.f32 %v98, %v296
    %v298 = vpop.f32.mrf.mxu0
    %v299 = vpop.f32.mrf.mxu0
    %v300 = vadd.f32 %v103, %v299
    %v301 = vpop.f32.mrf.mxu0
    %302 = vmatprep.mubr.bf16.mxu0 0
    %303 = vmatmul.mubr.bf16.gmra.mxu0 %v213
    %v304 = vpop.f32.mrf.mxu0
    %v305 = vadd.f32 %v108, %v304
    %v306 = vpop.f32.mrf.mxu0
    %v307 = vpop.f32.mrf.mxu0
    %v308 = vadd.f32 %v113, %v307
    %v309 = vpop.f32.mrf.mxu0
    %310 = vmatprep.mubr.bf16.mxu0 0
    %311 = vmatmul.mubr.bf16.gmra.mxu0 %v216
    %v312 = vpop.f32.mrf.mxu0
    %v313 = vadd.f32 %v118, %v312
    %v314 = vpop.f32.mrf.mxu0
    %v315 = vpop.f32.mrf.mxu0
    %v316 = vadd.f32 %v123, %v315
    %v317 = vpop.f32.mrf.mxu0
    %318 = vmatprep.mubr.bf16.mxu0 0
    %319 = vmatmul.mubr.bf16.gmra.mxu0 %v219
    %v320 = vpop.f32.mrf.mxu0
    %v321 = vadd.f32 %v128, %v320
    %v322 = vpop.f32.mrf.mxu0
    %v323 = vpop.f32.mrf.mxu0
    %v324 = vadd.f32 %v133, %v323
    %v325 = vpop.f32.mrf.mxu0
    %326 = vmatprep.mubr.bf16.mxu0 0
    %327 = vmatmul.mubr.bf16.gmra.mxu0 %v222
    %v328 = vpop.f32.mrf.mxu0
    %v329 = vadd.f32 %v138, %v328
    %v330 = vpop.f32.mrf.mxu0
    %v331 = vpop.f32.mrf.mxu0
    %v332 = vadd.f32 %v143, %v331
    %v333 = vpop.f32.mrf.mxu0
    %334 = vmatprep.mubr.bf16.mxu0 0
    %335 = vmatmul.mubr.bf16.gmra.mxu0 %v225
    %v336 = vpop.f32.mrf.mxu0
    %v337 = vadd.f32 %v148, %v336
    %v338 = vpop.f32.mrf.mxu0
    %v339 = vpop.f32.mrf.mxu0
    %v340 = vadd.f32 %v153, %v339
    %v341 = vpop.f32.mrf.mxu0
    %342 = vmatprep.mubr.bf16.mxu0 0
    %343 = vmatmul.mubr.bf16.gmra.mxu0 %v228
    %v344 = vpop.f32.mrf.mxu0
    %v345 = vadd.f32 %v158, %v344
    %v346 = vpop.f32.mrf.mxu0
    %v347 = vpop.f32.mrf.mxu0
    %v348 = vadd.f32 %v163, %v347
    %v349 = vpop.f32.mrf.mxu0
    %350 = vdwg.mxu0
    %v351 = vmax.f32 %v289, 0.0
    %v352 = vmax.f32 %v292, 0.0
    %v353 = vmax.f32 %v297, 0.0
    %v354 = vmax.f32 %v300, 0.0
    %v355 = vmax.f32 %v305, 0.0
    %v356 = vmax.f32 %v308, 0.0
    %v357 = vmax.f32 %v313, 0.0
    %v358 = vmax.f32 %v316, 0.0
    %v359 = vmax.f32 %v321, 0.0
    %v360 = vmax.f32 %v324, 0.0
    %v361 = vmax.f32 %v329, 0.0
    %v362 = vmax.f32 %v332, 0.0
    %v363 = vmax.f32 %v337, 0.0
    %v364 = vmax.f32 %v340, 0.0
    %v365 = vmax.f32 %v345, 0.0
    %v366 = vmax.f32 %v348, 0.0
    %v367 = vld [vmem:[%s3] sm:$0xf]
    %v368 = vld [vmem:[%s3 + $0x4] sm:$0xf]
    %v369 = vld [vmem:[%s3 + $0x8] sm:$0xf]
    %v370 = vld [vmem:[%s3 + $0xc] sm:$0xf]
    %v371 = vld [vmem:[%s3 + $0x10] sm:$0xf]
    %v372 = vld [vmem:[%s3 + $0x14] sm:$0xf]
    %v373 = vld [vmem:[%s3 + $0x18] sm:$0xf]
    %v374 = vld [vmem:[%s3 + $0x1c] sm:$0xf]
    %v375 = vpack.c.bf16 %v352, %v351
    %v376 = vpack.c.bf16 %v354, %v353
    %v377 = vpack.c.bf16 %v356, %v355
    %v378 = vpack.c.bf16 %v358, %v357
    %v379 = vpack.c.bf16 %v360, %v359
    %v380 = vpack.c.bf16 %v362, %v361
    %v381 = vpack.c.bf16 %v364, %v363
    %v382 = vpack.c.bf16 %v366, %v365
    %v383 = vld [vmem:[%s4] sm:$0xff]
    %v384 = vld [vmem:[%s4 + $0x8] sm:$0xff]
    %v385 = vld [vmem:[%s4 + $0x10] sm:$0xff]
    %v386 = vld [vmem:[%s4 + $0x18] sm:$0xff]
    %v387 = vld [vmem:[%s4 + $0x20] sm:$0xff]
    %v388 = vld [vmem:[%s4 + $0x28] sm:$0xff]
    %v389 = vld [vmem:[%s4 + $0x30] sm:$0xff]
    %v390 = vld [vmem:[%s4 + $0x38] sm:$0xff]
    %392 = vset.pattern.permute.xlu0 0
    %393 = vperm.xlu0 %392, %v383
    %v394 = vpop.permute.xlu0 %393
    %397 = vset.pattern.permute.xlu0 0
    %398 = vperm.xlu0 %397, %v384
    %v399 = vpop.permute.xlu0 %398
    %402 = vset.pattern.permute.xlu0 0
    %403 = vperm.xlu0 %402, %v385
    %v404 = vpop.permute.xlu0 %403
    %407 = vset.pattern.permute.xlu0 0
    %408 = vperm.xlu0 %407, %v386
    %v409 = vpop.permute.xlu0 %408
    %412 = vset.pattern.permute.xlu0 0
    %413 = vperm.xlu0 %412, %v387
    %v414 = vpop.permute.xlu0 %413
    %417 = vset.pattern.permute.xlu0 0
    %418 = vperm.xlu0 %417, %v388
    %v419 = vpop.permute.xlu0 %418
    %422 = vset.pattern.permute.xlu0 0
    %423 = vperm.xlu0 %422, %v389
    %v424 = vpop.permute.xlu0 %423
    %427 = vset.pattern.permute.xlu0 0
    %428 = vperm.xlu0 %427, %v390
    %v429 = vpop.permute.xlu0 %428
    %v439 = vunpack.c.l.b16 %v367
    %v440 = vunpack.c.l.b16 %v368
    %v441 = vunpack.c.l.b16 %v369
    %v442 = vunpack.c.l.b16 %v370
    %v443 = vunpack.c.l.b16 %v371
    %v444 = vunpack.c.l.b16 %v372
    %v445 = vunpack.c.l.b16 %v373
    %v446 = vunpack.c.l.b16 %v374
    %v447 = vpack.c.b16 %v440, %v439
    %v448 = vpack.c.b16 %v442, %v441
    %v449 = vpack.c.b16 %v444, %v443
    %v450 = vpack.c.b16 %v446, %v445
    %455 = vmatprep.subr.bf16.mxu0 0
    %456 = vmatpush1.bf16.msra.mxu0 %v382
    %457 = vmatprep.subr.bf16.mxu0 0
    %458 = vmatpush1.bf16.msra.mxu0 %v381
    %459 = vmatprep.subr.bf16.mxu0 0
    %460 = vmatpush1.bf16.msra.mxu0 %v380
    %461 = vmatprep.subr.bf16.mxu0 0
    %462 = vmatpush1.bf16.msra.mxu0 %v379
    %463 = vmatprep.subr.bf16.mxu0 0
    %464 = vmatpush1.bf16.msra.mxu0 %v378
    %465 = vmatprep.subr.bf16.mxu0 0
    %466 = vmatpush1.bf16.msra.mxu0 %v377
    %467 = vmatprep.subr.bf16.mxu0 0
    %468 = vmatpush1.bf16.msra.mxu0 %v376
    %469 = vmatprep.subr.bf16.mxu0 0
    %470 = vmatpush1.bf16.msra.mxu0 %v375
    %471 = vmatprep.subr.bf16.mxu0 0
    %472 = vmatpush2.bf16.msra.mxu0 0
    %473 = vmatprep.subr.bf16.mxu0 0
    %474 = vmatpush2.bf16.msra.mxu0 0
    %475 = vmatprep.subr.bf16.mxu0 0
    %476 = vmatpush2.bf16.msra.mxu0 0
    %477 = vmatprep.subr.bf16.mxu0 0
    %478 = vmatpush2.bf16.msra.mxu0 0
    %479 = vmatprep.subr.bf16.mxu0 0
    %480 = vmatpush2.bf16.msra.mxu0 0
    %481 = vmatprep.subr.bf16.mxu0 0
    %482 = vmatpush2.bf16.msra.mxu0 0
    %483 = vmatprep.subr.bf16.mxu0 0
    %484 = vmatpush2.bf16.msra.mxu0 0
    %485 = vmatprep.subr.bf16.mxu0 0
    %486 = vmatpush2.bf16.msra.mxu0 0
    %487 = vmatprep.mubr.bf16.mxu0 0
    %488 = vmatmul.mubr.bf16.gmra.mxu0 %v447
    %v489 = vpop.f32.mrf.mxu0
    %v490 = vadd.f32 %v394, %v489
    %v491 = vpop.f32.mrf.mxu0
    %v492 = vpop.f32.mrf.mxu0
    %v493 = vadd.f32 %v399, %v492
    %v494 = vpop.f32.mrf.mxu0
    %495 = vmatprep.mubr.bf16.mxu0 0
    %496 = vmatmul.mubr.bf16.gmra.mxu0 %v448
    %v497 = vpop.f32.mrf.mxu0
    %v498 = vadd.f32 %v404, %v497
    %v499 = vpop.f32.mrf.mxu0
    %v500 = vpop.f32.mrf.mxu0
    %v501 = vadd.f32 %v409, %v500
    %v502 = vpop.f32.mrf.mxu0
    %503 = vmatprep.mubr.bf16.mxu0 0
    %504 = vmatmul.mubr.bf16.gmra.mxu0 %v449
    %v505 = vpop.f32.mrf.mxu0
    %v506 = vadd.f32 %v414, %v505
    %v507 = vpop.f32.mrf.mxu0
    %v508 = vpop.f32.mrf.mxu0
    %v509 = vadd.f32 %v419, %v508
    %v510 = vpop.f32.mrf.mxu0
    %511 = vmatprep.mubr.bf16.mxu0 0
    %512 = vmatmul.mubr.bf16.gmra.mxu0 %v450
    %v513 = vpop.f32.mrf.mxu0
    %v514 = vadd.f32 %v424, %v513
    %v515 = vpop.f32.mrf.mxu0
    %v516 = vpop.f32.mrf.mxu0
    %v517 = vadd.f32 %v429, %v516
    %v518 = vpop.f32.mrf.mxu0
    %519 = vdwg.mxu0
    %v520 = vmax.f32 %v490, 0.0
    %v521 = vmax.f32 %v493, 0.0
    %v522 = vmax.f32 %v498, 0.0
    %v523 = vmax.f32 %v501, 0.0
    %v524 = vmax.f32 %v506, 0.0
    %v525 = vmax.f32 %v509, 0.0
    %v526 = vmax.f32 %v514, 0.0
    %v527 = vmax.f32 %v517, 0.0
    %v528 = vld [vmem:[%s5] sm:$0xff]
    %v529 = vld [vmem:[%s5 + $0x8] sm:$0xff]
    %v530 = vld [vmem:[%s5 + $0x10] sm:$0xff]
    %v531 = vld [vmem:[%s5 + $0x18] sm:$0xff]
    %v532 = vld [vmem:[%s5 + $0x20] sm:$0xff]
    %v533 = vld [vmem:[%s5 + $0x28] sm:$0xff]
    %v534 = vld [vmem:[%s5 + $0x30] sm:$0xff]
    %v535 = vld [vmem:[%s5 + $0x38] sm:$0xff]
    %537 = vset.pattern.permute.xlu0 0
    %538 = vperm.xlu0 %537, %v528
    %v539 = vpop.permute.xlu0 %538
    %542 = vset.pattern.permute.xlu0 0
    %543 = vperm.xlu0 %542, %v529
    %v544 = vpop.permute.xlu0 %543
    %547 = vset.pattern.permute.xlu0 0
    %548 = vperm.xlu0 %547, %v530
    %v549 = vpop.permute.xlu0 %548
    %552 = vset.pattern.permute.xlu0 0
    %553 = vperm.xlu0 %552, %v531
    %v554 = vpop.permute.xlu0 %553
    %557 = vset.pattern.permute.xlu0 0
    %558 = vperm.xlu0 %557, %v532
    %v559 = vpop.permute.xlu0 %558
    %562 = vset.pattern.permute.xlu0 0
    %563 = vperm.xlu0 %562, %v533
    %v564 = vpop.permute.xlu0 %563
    %567 = vset.pattern.permute.xlu0 0
    %568 = vperm.xlu0 %567, %v534
    %v569 = vpop.permute.xlu0 %568
    %572 = vset.pattern.permute.xlu0 0
    %573 = vperm.xlu0 %572, %v535
    %v574 = vpop.permute.xlu0 %573
    %v576 = vmul.f32 %v520, %v539
    %v577 = vmul.f32 %v521, %v544
    %v578 = vmul.f32 %v522, %v549
    %v579 = vmul.f32 %v523, %v554
    %v580 = vmul.f32 %v524, %v559
    %v581 = vmul.f32 %v525, %v564
    %v582 = vmul.f32 %v526, %v569
    %v583 = vmul.f32 %v527, %v574
    %v584 = vadd.f32 %v576, %v577
    %v585 = vadd.f32 %v584, %v578
    %v586 = vadd.f32 %v585, %v579
    %v587 = vadd.f32 %v586, %v580
    %v588 = vadd.f32 %v587, %v581
    %v589 = vadd.f32 %v588, %v582
    %v590 = vadd.f32 %v589, %v583
    %v591 = vrot.slane %v590, 4
    %v592 = vadd.f32 %v590, %v591
    %v593 = vrot.slane %v592, 2
    %v594 = vadd.f32 %v592, %v593
    %v595 = vrot.slane %v594, 1
    %v596 = vadd.f32 %v594, %v595
    %s597 = sld [smem:[#allocation2]]
    %v598 = vstv %s597
    %v599 = vadd.f32 %v596, %v598
    %600 = vst [vmem:[#allocation3] sm:$0x1] %v599
    // Predicated region
    $region30: #{tpu_custom_call.1} parent=1 // pred_check
      _
    $region31: #{tpu_custom_call.1} parent=1 // pred_check_branch
      %602 = sbr.rel (0) target = $region33
    $region32: #{tpu_custom_call.1} parent=1 // pred_region
      %s604 = ssub.s32 16, 16
      %605 = vsyncadd [#allocation4], %s604
      %s607 = sshll.u32 [#allocation3], 4
      %s608 = int_to_ptr.vmem [resolvable:$true] %s607
      %610 = dma.vmem_to_hbm [thread:$0]  %s608, 16, %s7, [#allocation4]
    $region33: #{tpu_custom_call.1} parent=1 // pred_fallthru
      _
    // Predicated region
    $region34: #{tpu_custom_call.1} parent=1 // pred_check
      _
    $region35: #{tpu_custom_call.1} parent=1 // pred_check_branch
      %612 = sbr.rel (0) target = $region37
    $region36: #{tpu_custom_call.1} parent=1 // pred_region
      %613 = dma.done [#allocation4], 16
    $region37: #{tpu_custom_call.1} parent=1 // pred_fallthru
      _
    %614 = vsyncpa [#allocation4], 1

</llo_original>
